<compile_context>
chip_gen: v5e
topology: v5e:2x2
jax: 0.10.0
libtpu: 0.0.40
codegen_flags: <defaults>
</compile_context>

<pallas_src>
import functools

import jax
import jax.numpy as jnp
from jax import lax
from jax.experimental import pallas as pl
from jax.experimental.pallas import tpu as pltpu


def _round_up(x, m):
    return (x + m - 1) // m * m


def _stoch_trans_kernel(x_ref, w1_ref, b1_ref, w2_ref, b2_ref,
                        wh_ref, bh_ref, out_ref, *, split):
    """One batch tile per grid step; all (padded, fused) weights resident in VMEM.

    Fused head layout is [loc | scale]: columns [0, split) hold loc,
    columns [split, head_p) hold the scale logits (exp applied here).
    """
    x = x_ref[...]
    # Hoist the (1, N) bias loads once per grid step.
    b1 = b1_ref[...]
    b2 = b2_ref[...]
    bh = bh_ref[...]

    # h1 = relu(x @ W1 + b1)   (bf16 operands on fast path, f32 accumulate)
    h1 = jnp.maximum(
        jnp.dot(x, w1_ref[...], preferred_element_type=jnp.float32) + b1, 0.0)
    h1 = h1.astype(w2_ref.dtype)

    # h2 = relu(h1 @ W2 + b2)
    h2 = jnp.maximum(
        jnp.dot(h1, w2_ref[...], preferred_element_type=jnp.float32) + b2, 0.0)
    h2 = h2.astype(wh_ref.dtype)

    # Fused heads.
    head = jnp.dot(h2, wh_ref[...], preferred_element_type=jnp.float32) + bh

    if split % 128 == 0:
        # 128-aligned static split: slices don't cross an (8,128) tile boundary,
        # both stores are lane-dense (unmasked vst), exp only on the scale half.
        out_ref[:, :split] = head[:, :split].astype(out_ref.dtype)
        out_ref[:, split:] = jnp.exp(head[:, split:]).astype(out_ref.dtype)
    else:
        # Tight-packed head (total width 128): single-vreg-wide lane mask.
        lane = lax.broadcasted_iota(jnp.int32, head.shape, dimension=1)
        out_ref[...] = jnp.where(lane >= split, jnp.exp(head),
                                 head).astype(out_ref.dtype)


@functools.partial(jax.jit, static_argnames=("block_b", "use_bf16"))
def stoch_trans_forward(x, params, *, block_b=None, use_bf16=True):
    """x: (B, input_dim) f32.  params: dict of pre-transposed weights/biases."""
    B, input_dim = x.shape
    hidden_dim = params["w1"].shape[1]
    output_dim = params["wl"].shape[1]

    # ---- lane-friendly padded sizes -----------------------------------------
    in_p = _round_up(input_dim, 128)
    hid_p = _round_up(hidden_dim, 128)
    # Fused [loc | scale] head.  For small output_dim pack both halves into a
    # single 128-lane vreg (halves head matmul N and output HBM writeback).
    half = 64 if output_dim <= 64 else _round_up(output_dim, 128)
    head_p = 2 * half

    # ---- batch tiling: split the work, never inflate it ----------------------
    if block_b is None:
        rows = _round_up(B, 16)                 # bf16 sublane tile = 16 rows
        if rows <= 32:
            block_b = rows                      # too small to split usefully
        elif rows <= 512:
            # 2 steps: feeds both v7x TensorCores without adding work.
            block_b = _round_up(pl.cdiv(rows, 2), 16)
        else:
            # >= 4 steps of <= 256 rows: steady pipeline, bounded VMEM temps.
            block_b = min(256, _round_up(pl.cdiv(rows, 4), 64))
    b_pad = _round_up(B, block_b)
    grid = (b_pad // block_b,)

    w_dtype = jnp.bfloat16 if use_bf16 else jnp.float32
    out_dtype = jnp.bfloat16 if use_bf16 else jnp.float32
    w_bytes = jnp.dtype(w_dtype).itemsize
    out_bytes = jnp.dtype(out_dtype).itemsize

    # ---- pad + fuse parameters (zero padding keeps the math exact) ----------
    def pad2(a, r, c):
        return jnp.pad(a, ((0, r - a.shape[0]), (0, c - a.shape[1])))

    w1 = pad2(params["w1"], in_p, hid_p).astype(w_dtype)
    b1 = pad2(params["b1"], 1, hid_p).astype(jnp.float32)
    w2 = pad2(params["w2"], hid_p, hid_p).astype(w_dtype)
    b2 = pad2(params["b2"], 1, hid_p).astype(jnp.float32)
    wh = jnp.concatenate(
        [pad2(params["wl"], hid_p, half), pad2(params["ws"], hid_p, half)],
        axis=1).astype(w_dtype)                                   # (hid_p, head_p)
    bh = jnp.concatenate(
        [pad2(params["bl"], 1, half), pad2(params["bs"], 1, half)],
        axis=1).astype(jnp.float32)                               # (1, head_p)

    x_p = jnp.pad(x, ((0, b_pad - B), (0, in_p - input_dim))).astype(w_dtype)

    # ---- specs ---------------------------------------------------------------
    def rep(shape):
        # Replicated (constant) operand: same full-array block every grid step.
        kwargs = {}
        if hid_p >= 512:
            # index_map is constant -> the second pipeline buffer is never used;
            # single-buffer large weights to halve their VMEM footprint.
            kwargs["pipeline_mode"] = pl.Buffered(1)
        return pl.BlockSpec(shape, lambda i: (0, 0), **kwargs)

    in_specs = [
        pl.BlockSpec((block_b, in_p), lambda i: (i, 0)),   # x tile
        rep((in_p, hid_p)),                                # w1
        rep((1, hid_p)),                                   # b1
        rep((hid_p, hid_p)),                               # w2
        rep((1, hid_p)),                                   # b2
        rep((hid_p, head_p)),                              # fused head weight
        rep((1, head_p)),                                  # fused head bias
    ]
    out_specs = pl.BlockSpec((block_b, head_p), lambda i: (i, 0))

    # ---- cost estimate (helps XLA schedule around the custom call) ----------
    flops = 2 * b_pad * (in_p * hid_p + hid_p * hid_p + hid_p * head_p)
    bytes_accessed = (b_pad * in_p * w_bytes
                      + (in_p * hid_p + hid_p * hid_p + hid_p * head_p) * w_bytes
                      + (2 * hid_p + head_p) * 4
                      + b_pad * head_p * out_bytes)
    cost = pl.CostEstimate(flops=flops,
                           transcendentals=b_pad * half,   # exp over scale half only
                           bytes_accessed=bytes_accessed)

    # ---- VMEM sizing: only raise the limit when actually needed -------------
    weight_bufs = 1 if hid_p >= 512 else 2
    vmem_est = (2 * block_b * in_p * w_bytes                          # x (dbl-buffered)
                + 2 * block_b * head_p * out_bytes                    # out (dbl-buffered)
                + weight_bufs * ((in_p + hid_p) * hid_p + hid_p * head_p) * w_bytes
                + weight_bufs * (2 * hid_p + head_p) * 4
                + block_b * (2 * hid_p + 2 * head_p) * 4              # live f32 temps
                + block_b * 2 * hid_p * w_bytes)                      # bf16 casts of h1/h2
    compiler_kwargs = dict(dimension_semantics=("parallel",))
    if vmem_est > 32 * 1024 * 1024:
        # Keep headroom below v7x's 64 MiB physical VMEM (compiler scratch etc.).
        compiler_kwargs["vmem_limit_bytes"] = int(min(vmem_est * 3 // 2,
                                                      48 * 1024 * 1024))

    out = pl.pallas_call(
        functools.partial(_stoch_trans_kernel, split=half),
        out_shape=jax.ShapeDtypeStruct((b_pad, head_p), out_dtype),
        grid_spec=pltpu.PrefetchScalarGridSpec(
            num_scalar_prefetch=0,
            grid=grid,
            in_specs=in_specs,
            out_specs=out_specs,
        ),
        compiler_params=pltpu.CompilerParams(**compiler_kwargs),
        cost_estimate=cost,
    )(x_p, w1, b1, w2, b2, wh, bh)

    loc = out[:B, :output_dim].astype(jnp.float32)
    scale = out[:B, half:half + output_dim].astype(jnp.float32)
    return loc, scale


def init_params(key, output_dim, input_dim, hidden_dim):
    """Deterministic init mimicking nn.Linear default (U[-1/sqrt(fan_in), +])."""
    ks = jax.random.split(key, 8)

    def lin(kw, kb, fan_in, fan_out):
        bound = 1.0 / jnp.sqrt(fan_in)
        # Stored pre-transposed: (fan_in, fan_out) so kernel does x @ W.
        w = jax.random.uniform(kw, (fan_in, fan_out), jnp.float32, -bound, bound)
        b = jax.random.uniform(kb, (1, fan_out), jnp.float32, -bound, bound)
        return w, b

    w1, b1 = lin(ks[0], ks[1], input_dim, hidden_dim)     # lin_z_to_hidden
    w2, b2 = lin(ks[2], ks[3], hidden_dim, hidden_dim)    # lin_hidden_to_hidden
    wl, bl = lin(ks[4], ks[5], hidden_dim, output_dim)    # lin_hidden_to_loc
    ws, bs = lin(ks[6], ks[7], hidden_dim, output_dim)    # lin_hidden_to_scale
    return dict(w1=w1, b1=b1, w2=w2, b2=b2, wl=wl, bl=bl, ws=ws, bs=bs)


def stoch_trans_ref(x, p):
    hi = jax.lax.Precision.HIGHEST
    h1 = jnp.maximum(jnp.dot(x, p["w1"], precision=hi) + p["b1"], 0.0)
    h2 = jnp.maximum(jnp.dot(h1, p["w2"], precision=hi) + p["b2"], 0.0)
    return (jnp.dot(h2, p["wl"], precision=hi) + p["bl"],
            jnp.exp(jnp.dot(h2, p["ws"], precision=hi) + p["bs"]))


if __name__ == "__main__":
    key = jax.random.PRNGKey(0)

    def run_case(k, batch, input_dim, hidden_dim, output_dim, f32_tol, bf16_tol):
        k_x, k_p = jax.random.split(k)
        x = jax.random.normal(k_x, (batch, input_dim), jnp.float32)
        params = init_params(k_p, output_dim, input_dim, hidden_dim)
        loc_ref, scale_ref = stoch_trans_ref(x, params)

        # Exact path (f32 matmul operands + f32 output) -- tight check.
        loc32, scale32 = stoch_trans_forward(x, params, use_bf16=False)
        jax.block_until_ready((loc32, scale32))
        assert jnp.allclose(loc32, loc_ref, atol=f32_tol, rtol=f32_tol)
        assert jnp.allclose(scale32, scale_ref, atol=f32_tol, rtol=f32_tol)

        # Fast path (bf16 operands, f32 accumulate, bf16 output) -- looser.
        loc, scale = stoch_trans_forward(x, params)
        jax.block_until_ready((loc, scale))
        assert jnp.allclose(loc, loc_ref, atol=bf16_tol, rtol=bf16_tol)
        assert jnp.allclose(scale, scale_ref, atol=bf16_tol, rtol=bf16_tol)

    k1, k2 = jax.random.split(key)
    # Tight-packed head (output_dim <= 64), single grid step.
    run_case(k1, batch=8, input_dim=16, hidden_dim=32, output_dim=16,
             f32_tol=1e-4, bf16_tol=5e-2)
    # 128-aligned split head + multi-step grid (exercises the sliced epilogue).
    run_case(k2, batch=40, input_dim=24, hidden_dim=48, output_dim=96,
             f32_tol=1e-3, bf16_tol=5e-2)

    print("KERNEL_OK")
</pallas_src>

<mosaic_0001>
module attributes {stable_mosaic.version = 11 : i64} {
  func.func @_stoch_trans_kernel(%arg0: i32, %arg1: memref<16x128xf32, #tpu.memory_space<vmem>>, %arg2: memref<128x128xf32, #tpu.memory_space<vmem>>, %arg3: memref<1x128xf32, #tpu.memory_space<vmem>>, %arg4: memref<128x128xf32, #tpu.memory_space<vmem>>, %arg5: memref<1x128xf32, #tpu.memory_space<vmem>>, %arg6: memref<128x128xf32, #tpu.memory_space<vmem>>, %arg7: memref<1x128xf32, #tpu.memory_space<vmem>>, %arg8: memref<16x128xf32, #tpu.memory_space<vmem>>) attributes {dimension_semantics = [#tpu.dimension_semantics<parallel>], iteration_bounds = array<i64: 1>, scalar_prefetch = 0 : i64, scratch_operands = 0 : i64, tpu.core_type = #tpu.core_type<tc>, window_params = [{transform_indices = @transform_0, window_bounds = array<i64: 16, 128>}, {pipeline_mode = #tpu.pipeline_mode<synchronous>, transform_indices = @transform_1, window_bounds = array<i64: 128, 128>}, {pipeline_mode = #tpu.pipeline_mode<synchronous>, transform_indices = @transform_2, window_bounds = array<i64: 1, 128>}, {pipeline_mode = #tpu.pipeline_mode<synchronous>, transform_indices = @transform_3, window_bounds = array<i64: 128, 128>}, {pipeline_mode = #tpu.pipeline_mode<synchronous>, transform_indices = @transform_4, window_bounds = array<i64: 1, 128>}, {pipeline_mode = #tpu.pipeline_mode<synchronous>, transform_indices = @transform_5, window_bounds = array<i64: 128, 128>}, {pipeline_mode = #tpu.pipeline_mode<synchronous>, transform_indices = @transform_6, window_bounds = array<i64: 1, 128>}, {transform_indices = @transform_7, window_bounds = array<i64: 16, 128>}]} {
    %c0 = arith.constant 0 : index
    %c0_0 = arith.constant 0 : index
    %0 = vector.load %arg1[%c0, %c0_0] : memref<16x128xf32, #tpu.memory_space<vmem>>, vector<16x128xf32>
    %c0_1 = arith.constant 0 : index
    %c0_2 = arith.constant 0 : index
    %1 = vector.load %arg3[%c0_1, %c0_2] : memref<1x128xf32, #tpu.memory_space<vmem>>, vector<1x128xf32>
    %c0_3 = arith.constant 0 : index
    %c0_4 = arith.constant 0 : index
    %2 = vector.load %arg5[%c0_3, %c0_4] : memref<1x128xf32, #tpu.memory_space<vmem>>, vector<1x128xf32>
    %c0_5 = arith.constant 0 : index
    %c0_6 = arith.constant 0 : index
    %3 = vector.load %arg7[%c0_5, %c0_6] : memref<1x128xf32, #tpu.memory_space<vmem>>, vector<1x128xf32>
    %c0_7 = arith.constant 0 : index
    %c0_8 = arith.constant 0 : index
    %4 = vector.load %arg2[%c0_7, %c0_8] : memref<128x128xf32, #tpu.memory_space<vmem>>, vector<128x128xf32>
    %cst = arith.constant dense<0.000000e+00> : vector<16x128xf32>
    %5 = tpu.matmul %0, %4, %cst {dimension_numbers = #tpu.dot_dimension_numbers<[1], [0], [0], [1], [0, 0, 1, 1], [], []>} : vector<16x128xf32>, vector<128x128xf32>, vector<16x128xf32> -> vector<16x128xf32>
    %6 = vector.broadcast %1 : vector<1x128xf32> to vector<16x128xf32>
    %7 = arith.addf %5, %6 : vector<16x128xf32>
    %cst_9 = arith.constant 0.000000e+00 : f32
    %8 = vector.broadcast %cst_9 : f32 to vector<16x128xf32>
    %9 = arith.maximumf %7, %8 : vector<16x128xf32>
    %c0_10 = arith.constant 0 : index
    %c0_11 = arith.constant 0 : index
    %10 = vector.load %arg4[%c0_10, %c0_11] : memref<128x128xf32, #tpu.memory_space<vmem>>, vector<128x128xf32>
    %cst_12 = arith.constant dense<0.000000e+00> : vector<16x128xf32>
    %11 = tpu.matmul %9, %10, %cst_12 {dimension_numbers = #tpu.dot_dimension_numbers<[1], [0], [0], [1], [0, 0, 1, 1], [], []>} : vector<16x128xf32>, vector<128x128xf32>, vector<16x128xf32> -> vector<16x128xf32>
    %12 = vector.broadcast %2 : vector<1x128xf32> to vector<16x128xf32>
    %13 = arith.addf %11, %12 : vector<16x128xf32>
    %cst_13 = arith.constant 0.000000e+00 : f32
    %14 = vector.broadcast %cst_13 : f32 to vector<16x128xf32>
    %15 = arith.maximumf %13, %14 : vector<16x128xf32>
    %c0_14 = arith.constant 0 : index
    %c0_15 = arith.constant 0 : index
    %16 = vector.load %arg6[%c0_14, %c0_15] : memref<128x128xf32, #tpu.memory_space<vmem>>, vector<128x128xf32>
    %cst_16 = arith.constant dense<0.000000e+00> : vector<16x128xf32>
    %17 = tpu.matmul %15, %16, %cst_16 {dimension_numbers = #tpu.dot_dimension_numbers<[1], [0], [0], [1], [0, 0, 1, 1], [], []>} : vector<16x128xf32>, vector<128x128xf32>, vector<16x128xf32> -> vector<16x128xf32>
    %18 = vector.broadcast %3 : vector<1x128xf32> to vector<16x128xf32>
    %19 = arith.addf %17, %18 : vector<16x128xf32>
    %20 = tpu.iota {dimensions = array<i32: 1>} : vector<16x128xi32>
    %c64_i32 = arith.constant 64 : i32
    %21 = vector.broadcast %c64_i32 : i32 to vector<16x128xi32>
    %22 = arith.cmpi sge, %20, %21 : vector<16x128xi32>
    %23 = math.exp %19 : vector<16x128xf32>
    %24 = arith.select %22, %23, %19 : vector<16x128xi1>, vector<16x128xf32>
    %c0_17 = arith.constant 0 : index
    %c0_18 = arith.constant 0 : index
    %25 = vector.load %arg8[%c0_17, %c0_18] : memref<16x128xf32, #tpu.memory_space<vmem>>, vector<16x128xf32>
    tpu.vector_store %arg8[%c0_17, %c0_18], %24 {strides = array<i32>} : memref<16x128xf32, #tpu.memory_space<vmem>>, vector<16x128xf32>,
    return
  }
  func.func @transform_0(%arg0: i32) -> (i32, i32) {
    %c0_i32 = arith.constant 0 : i32
    %c0_i32_0 = arith.constant 0 : i32
    return %arg0, %c0_i32 : i32, i32
  }
  func.func @transform_1(%arg0: i32) -> (i32, i32) {
    %c0_i32 = arith.constant 0 : i32
    %c0_i32_0 = arith.constant 0 : i32
    %c0_i32_1 = arith.constant 0 : i32
    return %c0_i32, %c0_i32_0 : i32, i32
  }
  func.func @transform_2(%arg0: i32) -> (i32, i32) {
    %c0_i32 = arith.constant 0 : i32
    %c0_i32_0 = arith.constant 0 : i32
    %c0_i32_1 = arith.constant 0 : i32
    return %c0_i32, %c0_i32_0 : i32, i32
  }
  func.func @transform_3(%arg0: i32) -> (i32, i32) {
    %c0_i32 = arith.constant 0 : i32
    %c0_i32_0 = arith.constant 0 : i32
    %c0_i32_1 = arith.constant 0 : i32
    return %c0_i32, %c0_i32_0 : i32, i32
  }
  func.func @transform_4(%arg0: i32) -> (i32, i32) {
    %c0_i32 = arith.constant 0 : i32
    %c0_i32_0 = arith.constant 0 : i32
    %c0_i32_1 = arith.constant 0 : i32
    return %c0_i32, %c0_i32_0 : i32, i32
  }
  func.func @transform_5(%arg0: i32) -> (i32, i32) {
    %c0_i32 = arith.constant 0 : i32
    %c0_i32_0 = arith.constant 0 : i32
    %c0_i32_1 = arith.constant 0 : i32
    return %c0_i32, %c0_i32_0 : i32, i32
  }
  func.func @transform_6(%arg0: i32) -> (i32, i32) {
    %c0_i32 = arith.constant 0 : i32
    %c0_i32_0 = arith.constant 0 : i32
    %c0_i32_1 = arith.constant 0 : i32
    return %c0_i32, %c0_i32_0 : i32, i32
  }
  func.func @transform_7(%arg0: i32) -> (i32, i32) {
    %c0_i32 = arith.constant 0 : i32
    %c0_i32_0 = arith.constant 0 : i32
    return %arg0, %c0_i32 : i32, i32
  }
}

</mosaic_0001>

<llo_original>
// kernel: stoch_trans_forward.1
$region0: #{stoch_trans_forward.1}
  #allocation0 [shape = 'u32[]', space=smem, size = 0x4, offset = 0x4, fixed_abs, tag = 'smem constant byte address 0x4 - core index']
  #allocation1 [shape = 'u32[72,128]{1,0:T(1,128)}', space=vmem, size = 0x9000, scoped, tag = 'internal scratch']
  %s0 = inlined_call_operand.vmem [shape: f32[16,128], index: 0, kind: input, shape index: {}]
  %s1 = inlined_call_operand.vmem [shape: f32[128,128], index: 1, kind: input, shape index: {}]
  %s2 = inlined_call_operand.vmem [shape: f32[1,128], index: 2, kind: input, shape index: {}]
  %s3 = inlined_call_operand.vmem [shape: f32[128,128], index: 3, kind: input, shape index: {}]
  %s4 = inlined_call_operand.vmem [shape: f32[1,128], index: 4, kind: input, shape index: {}]
  %s5 = inlined_call_operand.vmem [shape: f32[128,128], index: 5, kind: input, shape index: {}]
  %s6 = inlined_call_operand.vmem [shape: f32[1,128], index: 6, kind: input, shape index: {}]
  %s7 = inlined_call_operand.vmem [shape: f32[16,128], index: 7, kind: output, shape index: {}]
  %s8 = sld [smem:[#allocation0]]
  $region38: #{stoch_trans_forward.1} parent=0
    _
  %s10 = ssub.s32 1, %s8
  %s11 = scalar_select 0, %s10, %s8
  // Predicated region
  $region2: #{stoch_trans_forward.1} parent=0 // pred_check
    _
  $region3: #{stoch_trans_forward.1} parent=0 // pred_check_branch
    %13 = sbr.rel (0) target = $region5
  $region4: #{stoch_trans_forward.1} parent=0 // pred_region
    _
  $region5: #{stoch_trans_forward.1} parent=0 // pred_fallthru
    _
  // Predicated region
  $region6: #{stoch_trans_forward.1} parent=0 // pred_check
    _
  $region7: #{stoch_trans_forward.1} parent=0 // pred_check_branch
    %15 = sbr.rel (0) target = $region9
  $region8: #{stoch_trans_forward.1} parent=0 // pred_region
    _
  $region9: #{stoch_trans_forward.1} parent=0 // pred_fallthru
    _
  // Predicated region
  $region10: #{stoch_trans_forward.1} parent=0 // pred_check
    _
  $region11: #{stoch_trans_forward.1} parent=0 // pred_check_branch
    %17 = sbr.rel (0) target = $region13
  $region12: #{stoch_trans_forward.1} parent=0 // pred_region
    _
  $region13: #{stoch_trans_forward.1} parent=0 // pred_fallthru
    _
  // Predicated region
  $region14: #{stoch_trans_forward.1} parent=0 // pred_check
    _
  $region15: #{stoch_trans_forward.1} parent=0 // pred_check_branch
    %19 = sbr.rel (0) target = $region17
  $region16: #{stoch_trans_forward.1} parent=0 // pred_region
    _
  $region17: #{stoch_trans_forward.1} parent=0 // pred_fallthru
    _
  // Predicated region
  $region18: #{stoch_trans_forward.1} parent=0 // pred_check
    _
  $region19: #{stoch_trans_forward.1} parent=0 // pred_check_branch
    %21 = sbr.rel (0) target = $region21
  $region20: #{stoch_trans_forward.1} parent=0 // pred_region
    _
  $region21: #{stoch_trans_forward.1} parent=0 // pred_fallthru
    _
  // Predicated region
  $region22: #{stoch_trans_forward.1} parent=0 // pred_check
    _
  $region23: #{stoch_trans_forward.1} parent=0 // pred_check_branch
    %23 = sbr.rel (0) target = $region25
  $region24: #{stoch_trans_forward.1} parent=0 // pred_region
    _
  $region25: #{stoch_trans_forward.1} parent=0 // pred_fallthru
    _
  // Predicated region
  $region26: #{stoch_trans_forward.1} parent=0 // pred_check
    _
  $region27: #{stoch_trans_forward.1} parent=0 // pred_check_branch
    %25 = sbr.rel (0) target = $region29
  $region28: #{stoch_trans_forward.1} parent=0 // pred_region
    _
  $region29: #{stoch_trans_forward.1} parent=0 // pred_fallthru
    _
  %v26 = vld [vmem:[%s0] sm:$0xff]
  %v27 = vld [vmem:[%s0 + $0x8] sm:$0xff]
  %v28 = vld [vmem:[%s2] sm:$0x1]
  %v29 = vld [vmem:[%s4] sm:$0x1]
  %v30 = vld [vmem:[%s6] sm:$0x1]
  %v31 = vld [vmem:[%s1] sm:$0xff]
  %v32 = vld [vmem:[%s1 + $0x8] sm:$0xff]
  %v33 = vld [vmem:[%s1 + $0x10] sm:$0xff]
  %v34 = vld [vmem:[%s1 + $0x18] sm:$0xff]
  %v35 = vld [vmem:[%s1 + $0x20] sm:$0xff]
  %v36 = vld [vmem:[%s1 + $0x28] sm:$0xff]
  %v37 = vld [vmem:[%s1 + $0x30] sm:$0xff]
  %v38 = vld [vmem:[%s1 + $0x38] sm:$0xff]
  %v39 = vld [vmem:[%s1 + $0x40] sm:$0xff]
  %v40 = vld [vmem:[%s1 + $0x48] sm:$0xff]
  %v41 = vld [vmem:[%s1 + $0x50] sm:$0xff]
  %v42 = vld [vmem:[%s1 + $0x58] sm:$0xff]
  %v43 = vld [vmem:[%s1 + $0x60] sm:$0xff]
  %v44 = vld [vmem:[%s1 + $0x68] sm:$0xff]
  %v45 = vld [vmem:[%s1 + $0x70] sm:$0xff]
  %v46 = vld [vmem:[%s1 + $0x78] sm:$0xff]
  %v48 = vperm.slane %v28, 0
  %50 = vmatpush.msra.mxu0 %v46
  %51 = vmatpush.msra.mxu0 %v45
  %52 = vmatpush.msra.mxu0 %v44
  %53 = vmatpush.msra.mxu0 %v43
  %54 = vmatpush.msra.mxu0 %v42
  %55 = vmatpush.msra.mxu0 %v41
  %56 = vmatpush.msra.mxu0 %v40
  %57 = vmatpush.msra.mxu0 %v39
  %58 = vmatpush.msra.mxu0 %v38
  %59 = vmatpush.msra.mxu0 %v37
  %60 = vmatpush.msra.mxu0 %v36
  %61 = vmatpush.msra.mxu0 %v35
  %62 = vmatpush.msra.mxu0 %v34
  %63 = vmatpush.msra.mxu0 %v33
  %64 = vmatpush.msra.mxu0 %v32
  %65 = vmatpush.msra.mxu0 %v31
  %66 = vmatmul.f32.gmra.mxu0 %v26
  %v67 = vpop.f32.mrf.mxu0
  %v68 = vadd.f32 %v48, %v67
  %69 = vmatmul.f32.gmra.mxu0 %v27
  %v70 = vpop.f32.mrf.mxu0
  %v71 = vadd.f32 %v48, %v70
  %72 = vdwg.mxu0
  %v73 = vmax.f32 %v68, 0.0
  %v74 = vmax.f32 %v71, 0.0
  %v75 = vld [vmem:[%s3] sm:$0xff]
  %v76 = vld [vmem:[%s3 + $0x8] sm:$0xff]
  %v77 = vld [vmem:[%s3 + $0x10] sm:$0xff]
  %v78 = vld [vmem:[%s3 + $0x18] sm:$0xff]
  %v79 = vld [vmem:[%s3 + $0x20] sm:$0xff]
  %v80 = vld [vmem:[%s3 + $0x28] sm:$0xff]
  %v81 = vld [vmem:[%s3 + $0x30] sm:$0xff]
  %v82 = vld [vmem:[%s3 + $0x38] sm:$0xff]
  %v83 = vld [vmem:[%s3 + $0x40] sm:$0xff]
  %v84 = vld [vmem:[%s3 + $0x48] sm:$0xff]
  %v85 = vld [vmem:[%s3 + $0x50] sm:$0xff]
  %v86 = vld [vmem:[%s3 + $0x58] sm:$0xff]
  %v87 = vld [vmem:[%s3 + $0x60] sm:$0xff]
  %v88 = vld [vmem:[%s3 + $0x68] sm:$0xff]
  %v89 = vld [vmem:[%s3 + $0x70] sm:$0xff]
  %v90 = vld [vmem:[%s3 + $0x78] sm:$0xff]
  %v92 = vperm.slane %v29, 0
  %94 = vmatpush.msra.mxu0 %v90
  %95 = vmatpush.msra.mxu0 %v89
  %96 = vmatpush.msra.mxu0 %v88
  %97 = vmatpush.msra.mxu0 %v87
  %98 = vmatpush.msra.mxu0 %v86
  %99 = vmatpush.msra.mxu0 %v85
  %100 = vmatpush.msra.mxu0 %v84
  %101 = vmatpush.msra.mxu0 %v83
  %102 = vmatpush.msra.mxu0 %v82
  %103 = vmatpush.msra.mxu0 %v81
  %104 = vmatpush.msra.mxu0 %v80
  %105 = vmatpush.msra.mxu0 %v79
  %106 = vmatpush.msra.mxu0 %v78
  %107 = vmatpush.msra.mxu0 %v77
  %108 = vmatpush.msra.mxu0 %v76
  %109 = vmatpush.msra.mxu0 %v75
  %110 = vmatmul.f32.gmra.mxu0 %v73
  %v111 = vpop.f32.mrf.mxu0
  %v112 = vadd.f32 %v92, %v111
  %113 = vmatmul.f32.gmra.mxu0 %v74
  %v114 = vpop.f32.mrf.mxu0
  %v115 = vadd.f32 %v92, %v114
  %116 = vdwg.mxu0
  %v117 = vmax.f32 %v112, 0.0
  %v118 = vmax.f32 %v115, 0.0
  %v119 = vld [vmem:[%s5] sm:$0xff]
  %v120 = vld [vmem:[%s5 + $0x8] sm:$0xff]
  %v121 = vld [vmem:[%s5 + $0x10] sm:$0xff]
  %v122 = vld [vmem:[%s5 + $0x18] sm:$0xff]
  %v123 = vld [vmem:[%s5 + $0x20] sm:$0xff]
  %v124 = vld [vmem:[%s5 + $0x28] sm:$0xff]
  %v125 = vld [vmem:[%s5 + $0x30] sm:$0xff]
  %v126 = vld [vmem:[%s5 + $0x38] sm:$0xff]
  %v127 = vld [vmem:[%s5 + $0x40] sm:$0xff]
  %v128 = vld [vmem:[%s5 + $0x48] sm:$0xff]
  %v129 = vld [vmem:[%s5 + $0x50] sm:$0xff]
  %v130 = vld [vmem:[%s5 + $0x58] sm:$0xff]
  %v131 = vld [vmem:[%s5 + $0x60] sm:$0xff]
  %v132 = vld [vmem:[%s5 + $0x68] sm:$0xff]
  %v133 = vld [vmem:[%s5 + $0x70] sm:$0xff]
  %v134 = vld [vmem:[%s5 + $0x78] sm:$0xff]
  %v136 = vperm.slane %v30, 0
  %138 = vmatpush.msra.mxu0 %v134
  %139 = vmatpush.msra.mxu0 %v133
  %140 = vmatpush.msra.mxu0 %v132
  %141 = vmatpush.msra.mxu0 %v131
  %142 = vmatpush.msra.mxu0 %v130
  %143 = vmatpush.msra.mxu0 %v129
  %144 = vmatpush.msra.mxu0 %v128
  %145 = vmatpush.msra.mxu0 %v127
  %146 = vmatpush.msra.mxu0 %v126
  %147 = vmatpush.msra.mxu0 %v125
  %148 = vmatpush.msra.mxu0 %v124
  %149 = vmatpush.msra.mxu0 %v123
  %150 = vmatpush.msra.mxu0 %v122
  %151 = vmatpush.msra.mxu0 %v121
  %152 = vmatpush.msra.mxu0 %v120
  %153 = vmatpush.msra.mxu0 %v119
  %154 = vmatmul.f32.gmra.mxu0 %v117
  %v155 = vpop.f32.mrf.mxu0
  %v156 = vadd.f32 %v136, %v155
  %157 = vmatmul.f32.gmra.mxu0 %v118
  %v158 = vpop.f32.mrf.mxu0
  %v159 = vadd.f32 %v136, %v158
  %160 = vdwg.mxu0
  %v161 = vlaneseq
  %v162 = vand.u32 %v161, 127
  %vm163 = vcmp.ge.s32.totalorder %v162, 64
  %v164 = vmul.f32 %v156, 1.442695
  %v165 = vpow.pop %v164
  %v166 = vmul.f32 %v159, 1.442695
  %v167 = vpow.pop %v166
  %v168 = vsel %vm163, %v165, %v156
  %v169 = vsel %vm163, %v167, %v159
  %170 = vst [vmem:[%s7] sm:$0xff] %v168
  %171 = vst [vmem:[%s7 + $0x8] sm:$0xff] %v169
  // Predicated region
  $region30: #{stoch_trans_forward.1} parent=0 // pred_check
    _
  $region31: #{stoch_trans_forward.1} parent=0 // pred_check_branch
    %173 = sbr.rel (0) target = $region33
  $region32: #{stoch_trans_forward.1} parent=0 // pred_region
    _
  $region33: #{stoch_trans_forward.1} parent=0 // pred_fallthru
    _
  // Predicated region
  $region34: #{stoch_trans_forward.1} parent=0 // pred_check
    _
  $region35: #{stoch_trans_forward.1} parent=0 // pred_check_branch
    %175 = sbr.rel (0) target = $region37
  $region36: #{stoch_trans_forward.1} parent=0 // pred_region
    _
  $region37: #{stoch_trans_forward.1} parent=0 // pred_fallthru
    _

</llo_original>
